<compile_context>
chip_gen: v7x
topology: tpu7x:2x2x1
jax: 0.10.0
libtpu: 0.0.40
codegen_flags: <defaults>
</compile_context>

<pallas_src>
import math
import functools

import jax
import jax.numpy as jnp
from jax import lax
from jax.experimental import pallas as pl
from jax.experimental.pallas import tpu as pltpu

EPS = 1e-5  # torch.nn.LayerNorm default


# ---------------------------------------------------------------------------
# hardware / tiling helpers
# ---------------------------------------------------------------------------

def _sublane(dtype) -> int:
    """Minimum sublane multiple for a dtype (f32:8, bf16:16, int8/fp8:32)."""
    return {4: 8, 2: 16, 1: 32}.get(jnp.dtype(dtype).itemsize, 8)


@functools.lru_cache(maxsize=1)
def _vmem_budget_bytes() -> int:
    """~75% of physical per-core VMEM: ~96 MiB on v5e/v6e, ~48 MiB on v7x."""
    try:
        cap = int(pltpu.get_tpu_info().vmem_capacity_bytes)
    except Exception:
        cap = 64 << 20          # conservative fallback (v7x-sized)
    return (cap * 3) // 4


def _vmem_limit(nbytes: int) -> int:
    """Explicit scoped-VMEM request: actual buffers + 25% headroom, clamped to
    the generation-aware budget, with a floor for Mosaic internal scratch."""
    budget = _vmem_budget_bytes()
    return int(max(16 << 20, min(int(nbytes * 1.25), budget)))


def _pick_tile_rows(rows, per_row_bytes, fixed_bytes, dtype, max_rows=1024):
    """Largest sublane-multiple row tile whose pipelined buffers fit the VMEM
    budget; if a single tile would cover all rows, split in two so the M grid
    has >= 2 steps and both v7x TensorCores get work (cheap on v5e/v6e)."""
    sub = _sublane(dtype)
    if rows <= sub:
        return rows
    budget = _vmem_budget_bytes()
    avail = max(budget - fixed_bytes, sub * per_row_bytes)
    t = int(max(avail // max(int(per_row_bytes), 1), sub))
    t = min(t, max_rows, rows)
    t -= t % sub
    t = max(t, sub)
    if t < rows:
        return t
    half = -(-rows // 2)
    if half % sub:
        half += sub - (half % sub)
    return min(half, rows)


def _pick_tk(K):
    """Full-K blocks unless K is large; only tile K with a divisor so garbage
    from out-of-bounds input blocks can never leak into the accumulator."""
    if K <= 2048:
        return K
    for cand in (2048, 1024, 512, 256, 128):
        if K % cand == 0:
            return cand
    return K  # TODO(synk): pad K when it has no 128-multiple divisor


def _pick_tn(N):
    """Full-N blocks for typical hidden sizes; 256-wide (MXU-matched) otherwise.
    Partial N blocks are safe: their columns are masked on the output store."""
    return N if N <= 2048 else 256


# ---------------------------------------------------------------------------
# kernel: tiled linear (x @ W + b), optional fused ReLU
# ---------------------------------------------------------------------------

def _linear_kernel(x_ref, w_ref, b_ref, o_ref, acc_ref, *, activation):
    kk = pl.program_id(2)

    @pl.when(kk == 0)
    def _init():
        acc_ref[...] = jnp.zeros_like(acc_ref)

    # Operands go to the MXU in their native dtype; f32 accumulation only.
    acc_ref[...] += jnp.dot(x_ref[...], w_ref[...],
                            preferred_element_type=jnp.float32)

    @pl.when(kk == pl.num_programs(2) - 1)
    def _finalize():
        y = acc_ref[...] + b_ref[...]
        if activation == "relu":
            y = jnp.maximum(y, 0.0)
        o_ref[...] = y.astype(o_ref.dtype)


def linear(x, w_kn, bias, *, activation=None):
    """y = x @ w_kn + bias over the last axis. w_kn has shape (K, N)."""
    orig_shape = x.shape
    K = orig_shape[-1]
    N = w_kn.shape[1]
    rows = int(math.prod(orig_shape[:-1]))
    x2 = x.reshape(rows, K)
    b2 = bias.reshape(1, N).astype(jnp.float32)

    isz = jnp.dtype(x.dtype).itemsize
    w_isz = jnp.dtype(w_kn.dtype).itemsize
    tk = _pick_tk(K)
    tn = _pick_tn(N)
    fixed = 2 * tk * tn * w_isz + 2 * tn * 4            # weight + bias blocks
    per_row = 2 * tk * isz + 2 * tn * isz + tn * 4      # x, out (double-buf) + acc
    tm = _pick_tile_rows(rows, per_row, fixed, x.dtype)
    grid = (pl.cdiv(rows, tm), pl.cdiv(N, tn), pl.cdiv(K, tk))
    vmem_bytes = _vmem_limit(fixed + tm * per_row)

    out = pl.pallas_call(
        functools.partial(_linear_kernel, activation=activation),
        out_shape=jax.ShapeDtypeStruct((rows, N), x.dtype),
        grid_spec=pltpu.PrefetchScalarGridSpec(
            num_scalar_prefetch=0,
            grid=grid,
            in_specs=[
                pl.BlockSpec((tm, tk), lambda i, j, k: (i, k)),
                pl.BlockSpec((tk, tn), lambda i, j, k: (k, j)),
                pl.BlockSpec((1, tn), lambda i, j, k: (0, j)),
            ],
            out_specs=pl.BlockSpec((tm, tn), lambda i, j, k: (i, j)),
            scratch_shapes=[pltpu.VMEM((tm, tn), jnp.float32)],
        ),
        compiler_params=pltpu.CompilerParams(
            dimension_semantics=("parallel", "parallel", "arbitrary"),
            vmem_limit_bytes=vmem_bytes,
        ),
    )(x2, w_kn, b2)
    return out.reshape(orig_shape[:-1] + (N,))


# ---------------------------------------------------------------------------
# kernel: fused linear + residual-add + LayerNorm (merge proj / FFN fc2)
# ---------------------------------------------------------------------------

def _linear_add_ln_kernel(x_ref, w_ref, b_ref, r_ref, g_ref, bt_ref,
                          o_ref, acc_ref):
    kk = pl.program_id(1)

    @pl.when(kk == 0)
    def _init():
        acc_ref[...] = jnp.zeros_like(acc_ref)

    acc_ref[...] += jnp.dot(x_ref[...], w_ref[...],
                            preferred_element_type=jnp.float32)

    @pl.when(kk == pl.num_programs(1) - 1)
    def _finalize():
        y = acc_ref[...] + b_ref[...] + r_ref[...].astype(jnp.float32)
        mean = jnp.mean(y, axis=-1, keepdims=True)
        yc = y - mean
        var = jnp.mean(yc * yc, axis=-1, keepdims=True)   # biased var (PyTorch LN)
        y = yc * lax.rsqrt(var + EPS)
        y = y * g_ref[...] + bt_ref[...]
        o_ref[...] = y.astype(o_ref.dtype)


def linear_add_layer_norm(x, w_kn, bias, residual, gamma, beta):
    """LayerNorm(residual + (x @ w_kn + bias)) fused in one kernel.
    N (= hidden size) is kept whole per block so the row statistics are exact;
    K is grid-tiled with an f32 accumulator."""
    out_shape = residual.shape
    K = x.shape[-1]
    N = w_kn.shape[1]
    rows = int(math.prod(out_shape[:-1]))
    x2 = x.reshape(rows, K)
    r2 = residual.reshape(rows, N)
    b2 = bias.reshape(1, N).astype(jnp.float32)
    g2 = gamma.reshape(1, N).astype(jnp.float32)
    bt2 = beta.reshape(1, N).astype(jnp.float32)

    isz = jnp.dtype(x.dtype).itemsize
    r_isz = jnp.dtype(residual.dtype).itemsize
    w_isz = jnp.dtype(w_kn.dtype).itemsize
    tk = _pick_tk(K)
    fixed = 2 * tk * N * w_isz + 6 * N * 4
    per_row = 2 * tk * isz + 2 * N * r_isz + 2 * N * r_isz + N * 4
    tm = _pick_tile_rows(rows, per_row, fixed, x.dtype)
    grid = (pl.cdiv(rows, tm), pl.cdiv(K, tk))
    vmem_bytes = _vmem_limit(fixed + tm * per_row)

    out = pl.pallas_call(
        _linear_add_ln_kernel,
        out_shape=jax.ShapeDtypeStruct((rows, N), residual.dtype),
        grid_spec=pltpu.PrefetchScalarGridSpec(
            num_scalar_prefetch=0,
            grid=grid,
            in_specs=[
                pl.BlockSpec((tm, tk), lambda i, k: (i, k)),
                pl.BlockSpec((tk, N), lambda i, k: (k, 0)),
                pl.BlockSpec((1, N), lambda i, k: (0, 0)),
                pl.BlockSpec((tm, N), lambda i, k: (i, 0)),
                pl.BlockSpec((1, N), lambda i, k: (0, 0)),
                pl.BlockSpec((1, N), lambda i, k: (0, 0)),
            ],
            out_specs=pl.BlockSpec((tm, N), lambda i, k: (i, 0)),
            scratch_shapes=[pltpu.VMEM((tm, N), jnp.float32)],
        ),
        compiler_params=pltpu.CompilerParams(
            dimension_semantics=("parallel", "arbitrary"),
            vmem_limit_bytes=vmem_bytes,
        ),
    )(x2, w_kn, b2, r2, g2, bt2)
    return out.reshape(out_shape)


# ---------------------------------------------------------------------------
# kernel: multi-head attention, one grid step per batch element (all heads)
# ---------------------------------------------------------------------------

def _mha_kernel(q_ref, k_ref, v_ref, bias_ref, o_ref, *, scale):
    # (nh, Sq, Dh) per step: batching heads amortizes per-step/DMA overhead
    # and keeps the MXU fed even when Dh < 128.
    q = q_ref[0] * scale                               # fold scale into small q tile
    k = k_ref[0]
    v = v_ref[0]
    s = jnp.einsum("hqd,hkd->hqk", q, k,
                   preferred_element_type=jnp.float32)  # (nh, Sq, Sk)
    s = s + bias_ref[0]                                 # additive mask bias (1, Sk)
    s = s - jnp.max(s, axis=-1, keepdims=True)
    p = jnp.exp(s)
    denom = jnp.sum(p, axis=-1, keepdims=True)
    p = p * pl.reciprocal(denom, approx=True)           # EUP slot, keeps VALU free
    o = jnp.einsum("hqk,hkd->hqd", p.astype(v.dtype), v,
                   preferred_element_type=jnp.float32)  # (nh, Sq, Dh)
    o_ref[0] = o.astype(o_ref.dtype)


def multi_head_attention(q, k, v, bias, *, scale):
    """q: (B, nh, Sq, Dh), k/v: (B, nh, Sk, Dh), bias: (B, 1, Sk) additive."""
    # TODO(synk): flash-style KV tiling (online softmax, 'arbitrary' Sk axis)
    # for long sequences; whole-Sk scores are fine at these sizes.
    B, nh, Sq, Dh = q.shape
    Sk = k.shape[2]
    isz = jnp.dtype(q.dtype).itemsize
    blk = 2 * (2 * nh * Sq * Dh + 2 * nh * Sk * Dh) * isz + 2 * Sk * 4
    scratch = 3 * nh * Sq * Sk * 4 + 2 * nh * Sq * Dh * 4
    vmem_bytes = _vmem_limit(blk + scratch)

    return pl.pallas_call(
        functools.partial(_mha_kernel, scale=scale),
        out_shape=jax.ShapeDtypeStruct((B, nh, Sq, Dh), q.dtype),
        grid_spec=pltpu.PrefetchScalarGridSpec(
            num_scalar_prefetch=0,
            grid=(B,),
            in_specs=[
                pl.BlockSpec((1, nh, Sq, Dh), lambda b: (b, 0, 0, 0)),
                pl.BlockSpec((1, nh, Sk, Dh), lambda b: (b, 0, 0, 0)),
                pl.BlockSpec((1, nh, Sk, Dh), lambda b: (b, 0, 0, 0)),
                pl.BlockSpec((1, 1, Sk), lambda b: (b, 0, 0)),
            ],
            out_specs=pl.BlockSpec((1, nh, Sq, Dh), lambda b: (b, 0, 0, 0)),
        ),
        compiler_params=pltpu.CompilerParams(
            dimension_semantics=("parallel",),
            vmem_limit_bytes=vmem_bytes,
        ),
    )(q, k, v, bias)


# ---------------------------------------------------------------------------
# module composition (SGA forward)
# ---------------------------------------------------------------------------

def mhatt_forward(p, v_in, k_in, q_in, mask, *, num_heads, head_dim):
    """Q/K/V projections + batched multi-head attention. The output projection
    (linear_merge) is fused with the residual-add + LayerNorm by the caller."""
    B, Sq, Hd = q_in.shape
    Sk = k_in.shape[1]
    v = linear(v_in, p["wv"], p["bv"])
    k = linear(k_in, p["wk"], p["bk"])
    q = linear(q_in, p["wq"], p["bq"])

    def split_heads(t, S):
        # (B, S, H) -> (B, nh, S, Dh): reshape is free, transpose is one XLA op.
        # TODO(synk): pull head tiles straight out of (B, S, nh, Dh) with the
        # attention BlockSpec (removes these HBM round trips) once batched
        # dot_general with a non-leading batch dim lowers reliably in Mosaic.
        return t.reshape(B, S, num_heads, head_dim).transpose(0, 2, 1, 3)

    qh, kh, vh = split_heads(q, Sq), split_heads(k, Sk), split_heads(v, Sk)

    # Mask kept at (B, 1, Sk): no per-head HBM replication; the attention
    # BlockSpec re-reads the same small block for every batch's heads.
    if mask is None:
        bias = jnp.zeros((B, 1, Sk), jnp.float32)
    else:
        bias = jnp.where(mask.reshape(B, 1, Sk), -1e9, 0.0).astype(jnp.float32)

    att = multi_head_attention(qh, kh, vh, bias, scale=1.0 / math.sqrt(head_dim))
    att = att.transpose(0, 2, 1, 3).reshape(B, Sq, Hd)
    return att


def sga_forward(params, x, y, x_mask=None, y_mask=None, *, num_heads, head_dim):
    # TODO(synk): nn.Dropout layers are identity here (inference mode).
    p1 = params["mhatt1"]
    a1 = mhatt_forward(p1, x, x, x, x_mask,
                       num_heads=num_heads, head_dim=head_dim)
    x = linear_add_layer_norm(a1, p1["wm"], p1["bm"], x,
                              params["ln1_g"], params["ln1_b"])

    p2 = params["mhatt2"]
    a2 = mhatt_forward(p2, y, y, x, y_mask,
                       num_heads=num_heads, head_dim=head_dim)
    x = linear_add_layer_norm(a2, p2["wm"], p2["bm"], x,
                              params["ln2_g"], params["ln2_b"])

    h = linear(x, params["ffn"]["w1"], params["ffn"]["b1"], activation="relu")
    x = linear_add_layer_norm(h, params["ffn"]["w2"], params["ffn"]["b2"], x,
                              params["ln3_g"], params["ln3_b"])
    return x


# ---------------------------------------------------------------------------
# params + pure-JAX reference
# ---------------------------------------------------------------------------

def _init_linear(key, in_size, out_size):
    k1, k2 = jax.random.split(key)
    bound = 1.0 / math.sqrt(in_size)
    w = jax.random.uniform(k1, (in_size, out_size), jnp.float32, -bound, bound)
    b = jax.random.uniform(k2, (out_size,), jnp.float32, -bound, bound)
    return w, b


def init_sga_params(key, hidden, ff_size):
    keys = jax.random.split(key, 10)

    def mh(ks):
        wv, bv = _init_linear(ks[0], hidden, hidden)
        wk, bk = _init_linear(ks[1], hidden, hidden)
        wq, bq = _init_linear(ks[2], hidden, hidden)
        wm, bm = _init_linear(ks[3], hidden, hidden)
        return dict(wv=wv, bv=bv, wk=wk, bk=bk, wq=wq, bq=bq, wm=wm, bm=bm)

    w1, b1 = _init_linear(keys[8], hidden, ff_size)
    w2, b2 = _init_linear(keys[9], ff_size, hidden)
    ones = jnp.ones((hidden,), jnp.float32)
    zeros = jnp.zeros((hidden,), jnp.float32)
    return dict(
        mhatt1=mh(keys[0:4]),
        mhatt2=mh(keys[4:8]),
        ffn=dict(w1=w1, b1=b1, w2=w2, b2=b2),
        ln1_g=ones, ln1_b=zeros,
        ln2_g=ones, ln2_b=zeros,
        ln3_g=ones, ln3_b=zeros,
    )


def _ref_linear(x, w, b):
    return jnp.einsum("...k,kn->...n", x, w, precision=lax.Precision.HIGHEST) + b


def _ref_layernorm(x, g, b):
    mean = jnp.mean(x, axis=-1, keepdims=True)
    var = jnp.mean((x - mean) ** 2, axis=-1, keepdims=True)
    return (x - mean) / jnp.sqrt(var + EPS) * g + b


def _ref_mhatt(p, v_in, k_in, q_in, mask, num_heads, head_dim):
    B, Sq, Hd = q_in.shape
    Sk = k_in.shape[1]
    v = _ref_linear(v_in, p["wv"], p["bv"])
    k = _ref_linear(k_in, p["wk"], p["bk"])
    q = _ref_linear(q_in, p["wq"], p["bq"])

    def split(t, S):
        return t.reshape(B, S, num_heads, head_dim).transpose(0, 2, 1, 3)

    qh, kh, vh = split(q, Sq), split(k, Sk), split(v, Sk)
    s = jnp.einsum("bhqd,bhkd->bhqk", qh, kh,
                   precision=lax.Precision.HIGHEST) / math.sqrt(head_dim)
    if mask is not None:
        s = jnp.where(mask.reshape(B, 1, 1, Sk), -1e9, s)
    a = jax.nn.softmax(s, axis=-1)
    o = jnp.einsum("bhqk,bhkd->bhqd", a, vh, precision=lax.Precision.HIGHEST)
    o = o.transpose(0, 2, 1, 3).reshape(B, Sq, Hd)
    return _ref_linear(o, p["wm"], p["bm"])


def _ref_sga(params, x, y, x_mask=None, y_mask=None, *, num_heads, head_dim):
    x = _ref_layernorm(x + _ref_mhatt(params["mhatt1"], x, x, x, x_mask,
                                      num_heads, head_dim),
                       params["ln1_g"], params["ln1_b"])
    x = _ref_layernorm(x + _ref_mhatt(params["mhatt2"], y, y, x, y_mask,
                                      num_heads, head_dim),
                       params["ln2_g"], params["ln2_b"])
    h = jnp.maximum(_ref_linear(x, params["ffn"]["w1"], params["ffn"]["b1"]), 0.0)
    f = _ref_linear(h, params["ffn"]["w2"], params["ffn"]["b2"])
    return _ref_layernorm(x + f, params["ln3_g"], params["ln3_b"])


# ---------------------------------------------------------------------------

if __name__ == "__main__":
    key = jax.random.PRNGKey(0)
    batch, img_seq, txt_seq = 2, 16, 8
    hidden, num_heads, ff_size = 32, 4, 64
    head_dim = hidden // num_heads

    k_params, kx, ky = jax.random.split(key, 3)
    params = init_sga_params(k_params, hidden, ff_size)
    x = jax.random.normal(kx, (batch, img_seq, hidden), jnp.float32)
    y = jax.random.normal(ky, (batch, txt_seq, hidden), jnp.float32)

    out = sga_forward(params, x, y, None, None,
                      num_heads=num_heads, head_dim=head_dim)
    out = jax.block_until_ready(out)

    ref = _ref_sga(params, x, y, None, None,
                   num_heads=num_heads, head_dim=head_dim)
    assert out.shape == (batch, img_seq, hidden)
    # tolerance covers the EUP approximate-reciprocal softmax denominator
    assert jnp.allclose(out, ref, atol=2e-3, rtol=2e-3), "mismatch vs reference"

    print("KERNEL_OK")
</pallas_src>

<mosaic_0001>
module attributes {stable_mosaic.version = 11 : i64} {
  func.func @_linear_kernel(%arg0: i32, %arg1: i32, %arg2: i32, %arg3: memref<16x32xf32, #tpu.memory_space<vmem>>, %arg4: memref<32x32xf32, #tpu.memory_space<vmem>>, %arg5: memref<1x32xf32, #tpu.memory_space<vmem>>, %arg6: memref<16x32xf32, #tpu.memory_space<vmem>>, %arg7: memref<16x32xf32, #tpu.memory_space<vmem>>) attributes {dimension_semantics = [#tpu.dimension_semantics<parallel>, #tpu.dimension_semantics<parallel>, #tpu.dimension_semantics<arbitrary>], iteration_bounds = array<i64: 2, 1, 1>, scalar_prefetch = 0 : i64, scratch_operands = 1 : i64, tpu.core_type = #tpu.core_type<tc>, window_params = [{transform_indices = @transform_0, window_bounds = array<i64: 16, 32>}, {transform_indices = @transform_1, window_bounds = array<i64: 32, 32>}, {transform_indices = @transform_2, window_bounds = array<i64: 1, 32>}, {transform_indices = @transform_3, window_bounds = array<i64: 16, 32>}]} {
    %c0_i32 = arith.constant 0 : i32
    %0 = arith.cmpi eq, %arg2, %c0_i32 : i32
    %1 = arith.extui %0 : i1 to i32
    %c0_i32_0 = arith.constant 0 : i32
    %2 = arith.cmpi ne, %1, %c0_i32_0 : i32
    scf.if %2 {
      %cst_10 = arith.constant 0.000000e+00 : f32
      %12 = vector.broadcast %cst_10 : f32 to vector<16x32xf32>
      %c0_11 = arith.constant 0 : index
      %c0_12 = arith.constant 0 : index
      %13 = vector.load %arg7[%c0_11, %c0_12] : memref<16x32xf32, #tpu.memory_space<vmem>>, vector<16x32xf32>
      tpu.vector_store %arg7[%c0_11, %c0_12], %12 {strides = array<i32>} : memref<16x32xf32, #tpu.memory_space<vmem>>, vector<16x32xf32>,
    } else {
    }
    %c0 = arith.constant 0 : index
    %c0_1 = arith.constant 0 : index
    %3 = vector.load %arg7[%c0, %c0_1] : memref<16x32xf32, #tpu.memory_space<vmem>>, vector<16x32xf32>
    %c0_2 = arith.constant 0 : index
    %c0_3 = arith.constant 0 : index
    %4 = vector.load %arg3[%c0_2, %c0_3] : memref<16x32xf32, #tpu.memory_space<vmem>>, vector<16x32xf32>
    %c0_4 = arith.constant 0 : index
    %c0_5 = arith.constant 0 : index
    %5 = vector.load %arg4[%c0_4, %c0_5] : memref<32x32xf32, #tpu.memory_space<vmem>>, vector<32x32xf32>
    %cst = arith.constant dense<0.000000e+00> : vector<16x32xf32>
    %6 = tpu.matmul %4, %5, %cst {dimension_numbers = #tpu.dot_dimension_numbers<[1], [0], [0], [1], [0, 0, 1, 1], [], []>} : vector<16x32xf32>, vector<32x32xf32>, vector<16x32xf32> -> vector<16x32xf32>
    %7 = arith.addf %3, %6 : vector<16x32xf32>
    %c0_6 = arith.constant 0 : index
    %c0_7 = arith.constant 0 : index
    %8 = vector.load %arg7[%c0_6, %c0_7] : memref<16x32xf32, #tpu.memory_space<vmem>>, vector<16x32xf32>
    tpu.vector_store %arg7[%c0_6, %c0_7], %7 {strides = array<i32>} : memref<16x32xf32, #tpu.memory_space<vmem>>, vector<16x32xf32>,
    %c0_i32_8 = arith.constant 0 : i32
    %9 = arith.cmpi eq, %arg2, %c0_i32_8 : i32
    %10 = arith.extui %9 : i1 to i32
    %c0_i32_9 = arith.constant 0 : i32
    %11 = arith.cmpi ne, %10, %c0_i32_9 : i32
    scf.if %11 {
      %c0_10 = arith.constant 0 : index
      %c0_11 = arith.constant 0 : index
      %12 = vector.load %arg7[%c0_10, %c0_11] : memref<16x32xf32, #tpu.memory_space<vmem>>, vector<16x32xf32>
      %c0_12 = arith.constant 0 : index
      %c0_13 = arith.constant 0 : index
      %13 = vector.load %arg5[%c0_12, %c0_13] : memref<1x32xf32, #tpu.memory_space<vmem>>, vector<1x32xf32>
      %14 = vector.broadcast %13 : vector<1x32xf32> to vector<16x32xf32>
      %15 = arith.addf %12, %14 : vector<16x32xf32>
      %c0_14 = arith.constant 0 : index
      %c0_15 = arith.constant 0 : index
      %16 = vector.load %arg6[%c0_14, %c0_15] : memref<16x32xf32, #tpu.memory_space<vmem>>, vector<16x32xf32>
      tpu.vector_store %arg6[%c0_14, %c0_15], %15 {strides = array<i32>} : memref<16x32xf32, #tpu.memory_space<vmem>>, vector<16x32xf32>,
    } else {
    }
    return
  }
  func.func @transform_0(%arg0: i32, %arg1: i32, %arg2: i32) -> (i32, i32) {
    %c0_i32 = arith.constant 0 : i32
    return %arg0, %arg2 : i32, i32
  }
  func.func @transform_1(%arg0: i32, %arg1: i32, %arg2: i32) -> (i32, i32) {
    %c0_i32 = arith.constant 0 : i32
    return %arg2, %arg1 : i32, i32
  }
  func.func @transform_2(%arg0: i32, %arg1: i32, %arg2: i32) -> (i32, i32) {
    %c0_i32 = arith.constant 0 : i32
    %c0_i32_0 = arith.constant 0 : i32
    return %c0_i32, %arg1 : i32, i32
  }
  func.func @transform_3(%arg0: i32, %arg1: i32, %arg2: i32) -> (i32, i32) {
    %c0_i32 = arith.constant 0 : i32
    return %arg0, %arg1 : i32, i32
  }
}

</mosaic_0001>

<llo_original>
// kernel: tpu_custom_call.1
$region0: #{tpu_custom_call.1}
  #allocation0 [shape = 'u32[]', space=smem, size = 0x4, offset = 0x4, fixed_abs, tag = 'smem constant byte address 0x4 - core index']
  #allocation1 [shape = 'u32[144,128]{1,0:T(1,128)}', space=vmem, size = 0x12000, scoped, tag = 'internal scratch']
  #allocation2 [shape = 'f32[16,32]{1,0:T(8,128)}', space=vmem, size = 0x2000, scoped, tag = 'scratch operand']
  %s0 = inlined_call_operand.hbm [shape: f32[32,32], index: 0, kind: input, shape index: {}]
  %s1 = inlined_call_operand.hbm [shape: f32[32,32], index: 1, kind: input, shape index: {}]
  %s2 = inlined_call_operand.vmem [shape: f32[1,32], index: 2, kind: input, shape index: {}]
  %s3 = inlined_call_operand.hbm [shape: f32[32,32], index: 3, kind: output, shape index: {}]
  %s4 = sld [smem:[#allocation0]]
  $region61: #{tpu_custom_call.1} parent=0
    _
  %s6 = ssub.s32 1, %s4
  %s7 = scalar_select 0, %s6, %s4
  $region1: #{tpu_custom_call.1} parent=0
    #allocation3 [shape = 'u8[16384]{0}', space=vmem, size = 0x4000, scoped, tag = 'input window, operand 0']
    #allocation4 [shape = 's32[2]{0}', space=sflag, size = 0x8, scoped, tag = 'scoped memory for tpu_custom_call.1']
    #allocation5 [shape = 's32[2]{0}', space=sflag, size = 0x8, scoped, tag = 'scoped memory for tpu_custom_call.1']
    #allocation6 [shape = 'u8[16384]{0}', space=vmem, size = 0x4000, scoped, tag = 'input window, operand 1, single buffered']
    #allocation7 [shape = 's32[1]{0}', space=sflag, size = 0x4, scoped, tag = 'scoped memory for tpu_custom_call.1']
    #allocation8 [shape = 'u8[16384]{0}', space=vmem, size = 0x4000, scoped, tag = 'output window, operand 0']
    %8 = vsyncpa [#allocation4], 0
    %s9 = scalar_lea.sflag [#allocation4], 1
    %10 = vsyncpa %s9, 0
    %11 = vsyncpa [#allocation7], 0
    %12 = vsyncpa [#allocation5], 0
    %s13 = scalar_lea.sflag [#allocation5], 1
    %14 = vsyncpa %s13, 0
    loop: start=0, step=1, limit=4
    $region2: #{tpu_custom_call.1} parent=1 // loop_pre_header
      _
    $region3: #{tpu_custom_call.1} parent=1 // loop_header
      %s16 = sphi 0, %s20
      %p17 = scmp.ge.s32.totalorder %s16, 4
      %s23 = sphi 0, %s42
      %s24 = sphi 0, %s38
      %s25 = sphi 0, %s34
      %s26 = sphi 0, %s23
      %s27 = sphi 0, %s24
      %s28 = sphi 0, %s25
      %s29 = sphi 0, %s26
      %s30 = sphi 0, %s27
      %s31 = sphi 0, %s28
      %s47 = sphi 0, %s49
      %s50 = sphi 0, %s47
      %s51 = sphi 0, %s50
      %s67 = sphi 0, %s51
      %s75 = sphi 0, %s77
      %s78 = sphi 0, %s75
      %s79 = sphi 0, %s78
      %s95 = sphi 0, %s79
      %s101 = sphi 0, %s103
      %s104 = sphi 0, %s101
      %s105 = sphi 0, %s104
      %s121 = sphi 0, %s105
      %s129 = sphi 0, %s131
      %s132 = sphi 0, %s129
      %s133 = sphi 0, %s132
      %s149 = sphi 0, %s133
    $region4: #{tpu_custom_call.1} parent=1 // loop_header_branch
      %19 = sbr.rel (%p17) target = $region8
    $region5: #{tpu_custom_call.1} parent=1 // loop_body
      %s21 = ssub.s32 %s16, 1
      %s22 = ssub.s32 %s16, 2
      %s32 = sadd.s32 1, %s25
      %p33 = scmp.ge.s32.totalorder %s32, 1
      %s34 = scalar_select %p33, 0, %s32
      %s35 = sadd.s32 1, %s24
      %s36 = scalar_select %p33, %s35, %s24
      %p37 = scmp.ge.s32.totalorder %s36, 1
      %s38 = scalar_select %p37, 0, %s36
      %s39 = sadd.s32 1, %s23
      %s40 = scalar_select %p37, %s39, %s23
      %p41 = scmp.ge.s32.totalorder %s40, 2
      %s42 = scalar_select %p41, 0, %s40
      %s43 = ssub.s32 %s23, %s42
      %s44 = ssub.s32 %s25, %s34
      %s45 = sor.u32 %s43, %s44
      %p46 = scmp.eq.s32.totalorder %s45, 0
      %s48 = sadd.s32 %s47, 1
      %s49 = scalar_select %p46, %s47, %s48
      %p52 = pneg %p46
      %p53 = scmp.eq.s32.totalorder %s16, 1
      %p54 = por %p52, %p53
      %p55 = scmp.ne.s32.totalorder %s47, %s50
      %p56 = scmp.eq.s32.totalorder %s16, 0
      %p57 = por %p55, %p56
      %p58 = scmp.ne.s32.totalorder %s47, %s50
      %p59 = scmp.eq.s32.totalorder %s21, 1
      %p60 = por %p58, %p59
      %p61 = scmp.ne.s32.totalorder %s50, %s51
      %p62 = scmp.eq.s32.totalorder %s21, 0
      %p63 = por %p61, %p62
      %p64 = scmp.ne.s32.totalorder %s50, %s51
      %p65 = scmp.eq.s32.totalorder %s22, 1
      %p66 = por %p64, %p65
      %p68 = scmp.ne.s32.totalorder %s51, %s67
      %p69 = scmp.eq.s32.totalorder %s22, 0
      %p70 = por %p68, %p69
      %s71 = ssub.s32 %s25, %s34
      %s72 = ssub.s32 %s24, %s38
      %s73 = sor.u32 %s71, %s72
      %p74 = scmp.eq.s32.totalorder %s73, 0
      %s76 = sadd.s32 %s75, 1
      %s77 = scalar_select %p74, %s75, %s76
      %p80 = pneg %p74
      %p81 = scmp.eq.s32.totalorder %s16, 1
      %p82 = por %p80, %p81
      %p83 = scmp.ne.s32.totalorder %s75, %s78
      %p84 = scmp.eq.s32.totalorder %s16, 0
      %p85 = por %p83, %p84
      %p86 = scmp.ne.s32.totalorder %s75, %s78
      %p87 = scmp.eq.s32.totalorder %s21, 1
      %p88 = por %p86, %p87
      %p89 = scmp.ne.s32.totalorder %s78, %s79
      %p90 = scmp.eq.s32.totalorder %s21, 0
      %p91 = por %p89, %p90
      %p92 = scmp.ne.s32.totalorder %s78, %s79
      %p93 = scmp.eq.s32.totalorder %s22, 1
      %p94 = por %p92, %p93
      %p96 = scmp.ne.s32.totalorder %s79, %s95
      %p97 = scmp.eq.s32.totalorder %s22, 0
      %p98 = por %p96, %p97
      %s99 = ssub.s32 %s24, %s38
      %p100 = scmp.eq.s32.totalorder %s99, 0
      %s102 = sadd.s32 %s101, 1
      %s103 = scalar_select %p100, %s101, %s102
      %p106 = pneg %p100
      %p107 = scmp.eq.s32.totalorder %s16, 1
      %p108 = por %p106, %p107
      %p109 = scmp.ne.s32.totalorder %s101, %s104
      %p110 = scmp.eq.s32.totalorder %s16, 0
      %p111 = por %p109, %p110
      %p112 = scmp.ne.s32.totalorder %s101, %s104
      %p113 = scmp.eq.s32.totalorder %s21, 1
      %p114 = por %p112, %p113
      %p115 = scmp.ne.s32.totalorder %s104, %s105
      %p116 = scmp.eq.s32.totalorder %s21, 0
      %p117 = por %p115, %p116
      %p118 = scmp.ne.s32.totalorder %s104, %s105
      %p119 = scmp.eq.s32.totalorder %s22, 1
      %p120 = por %p118, %p119
      %p122 = scmp.ne.s32.totalorder %s105, %s121
      %p123 = scmp.eq.s32.totalorder %s22, 0
      %p124 = por %p122, %p123
      %s125 = ssub.s32 %s23, %s42
      %s126 = ssub.s32 %s24, %s38
      %s127 = sor.u32 %s125, %s126
      %p128 = scmp.eq.s32.totalorder %s127, 0
      %s130 = sadd.s32 %s129, 1
      %s131 = scalar_select %p128, %s129, %s130
      %p134 = pneg %p128
      %p135 = scmp.eq.s32.totalorder %s16, 1
      %p136 = por %p134, %p135
      %p137 = scmp.ne.s32.totalorder %s129, %s132
      %p138 = scmp.eq.s32.totalorder %s16, 0
      %p139 = por %p137, %p138
      %p140 = scmp.ne.s32.totalorder %s129, %s132
      %p141 = scmp.eq.s32.totalorder %s21, 1
      %p142 = por %p140, %p141
      %p143 = scmp.ne.s32.totalorder %s132, %s133
      %p144 = scmp.eq.s32.totalorder %s21, 0
      %p145 = por %p143, %p144
      %p146 = scmp.ne.s32.totalorder %s132, %s133
      %p147 = scmp.eq.s32.totalorder %s22, 1
      %p148 = por %p146, %p147
      %p150 = scmp.ne.s32.totalorder %s133, %s149
      %p151 = scmp.eq.s32.totalorder %s22, 0
      %p152 = por %p150, %p151
      %p153 = scmp.le.s32.totalorder 1, %s16
      %p154 = scmp.lt.s32.totalorder %s16, 3
      %p155 = pnand %p153, %p154
      %p156 = pneg %p155
      // Predicated region
      $region9: #{tpu_custom_call.1} parent=5 // pred_check
        _
      $region10: #{tpu_custom_call.1} parent=5 // pred_check_branch
        %158 = sbr.rel (%p155) target = $region12
      $region11: #{tpu_custom_call.1} parent=5 // pred_region
        %s159 = ssub.s32 %s16, 1
        // Predicated region
        $region13: #{tpu_custom_call.1} parent=11 // pred_check
          %p160 = pneg %p91
        $region14: #{tpu_custom_call.1} parent=11 // pred_check_branch
          %162 = sbr.rel (%p160) target = $region16
        $region15: #{tpu_custom_call.1} parent=11 // pred_region
          %s163 = smul.u32 4, %s28
          %s165 = ssub.s32 512, 512
          %166 = vsyncadd [#allocation7], %s165
          %s167 = sadd.s32 %s27, %s163
          %s168 = smul.addr %s167, 128
          %s169 = scalar_lea.hbm %s1, %s168
          %s170 = sshll.u32 [#allocation6], 4
          %s171 = int_to_ptr.vmem [resolvable:$true] %s170
          %176 = dma.hbm_to_vmem [thread:$0]  %s169, 512, %s171, [#allocation7], 128, 128, 8
        $region16: #{tpu_custom_call.1} parent=11 // pred_fallthru
          _
        // Predicated region
        $region17: #{tpu_custom_call.1} parent=11 // pred_check
          %p177 = pneg %p117
        $region18: #{tpu_custom_call.1} parent=11 // pred_check_branch
          %179 = sbr.rel (%p177) target = $region20
        $region19: #{tpu_custom_call.1} parent=11 // pred_region
          %p180 = scmp.lt.s32.totalorder %s27, 0
          %s181 = scalar_select %p180, %s27, 0
          %s182 = scalar_lea.vmem %s2, %s181
        $region20: #{tpu_custom_call.1} parent=11 // pred_fallthru
          _
      $region12: #{tpu_custom_call.1} parent=5 // pred_fallthru
        _
      %p183 = scmp.lt.s32.totalorder %s16, 2
      // Predicated region
      $region21: #{tpu_custom_call.1} parent=5 // pred_check
        %p184 = pneg %p183
      $region22: #{tpu_custom_call.1} parent=5 // pred_check_branch
        %186 = sbr.rel (%p184) target = $region24
      $region23: #{tpu_custom_call.1} parent=5 // pred_region
        // Predicated region
        $region25: #{tpu_custom_call.1} parent=23 // pred_check
          %p187 = pneg %p57
        $region26: #{tpu_custom_call.1} parent=23 // pred_check_branch
          %189 = sbr.rel (%p187) target = $region28
        $region27: #{tpu_custom_call.1} parent=23 // pred_region
          %s190 = sand.u32 %s47, 1
          %s191 = scalar_lea.sflag [#allocation4], %s190
          %s192 = sand.u32 %s47, 1
          %s193 = smul.addr %s192, 16
          %s194 = scalar_lea.vmem [#allocation3], %s193
          %s195 = smul.u32 2, %s23
          %s197 = ssub.s32 256, 256
          %198 = vsyncadd %s191, %s197
          %s199 = sadd.s32 %s25, %s195
          %s200 = smul.addr %s199, 128
          %s201 = scalar_lea.hbm %s0, %s200
          %s202 = sshll.u32 %s194, 4
          %s203 = int_to_ptr.vmem [resolvable:$true] %s202
          %208 = dma.hbm_to_vmem [thread:$0]  %s201, 256, %s203, %s191, 128, 128, 8
        $region28: #{tpu_custom_call.1} parent=23 // pred_fallthru
          _
      $region24: #{tpu_custom_call.1} parent=5 // pred_fallthru
        _
      %p209 = scmp.le.s32.totalorder 1, %s16
      %p210 = scmp.lt.s32.totalorder %s16, 3
      %p211 = pnand %p209, %p210
      %p212 = pneg %p211
      // Predicated region
      $region29: #{tpu_custom_call.1} parent=5 // pred_check
        _
      $region30: #{tpu_custom_call.1} parent=5 // pred_check_branch
        %214 = sbr.rel (%p211) target = $region32
      $region31: #{tpu_custom_call.1} parent=5 // pred_region
        %s215 = ssub.s32 %s16, 1
        %s216 = sand.u32 %s50, 1
        %s217 = scalar_lea.sflag [#allocation4], %s216
        %s218 = sand.u32 %s50, 1
        %s219 = smul.addr %s218, 16
        %s220 = scalar_lea.vmem [#allocation3], %s219
        // Predicated region
        $region33: #{tpu_custom_call.1} parent=31 // pred_check
          %p221 = pneg %p63
        $region34: #{tpu_custom_call.1} parent=31 // pred_check_branch
          %223 = sbr.rel (%p221) target = $region36
        $region35: #{tpu_custom_call.1} parent=31 // pred_region
          %224 = dma.done %s217, 256
        $region36: #{tpu_custom_call.1} parent=31 // pred_fallthru
          _
        // Predicated region
        $region37: #{tpu_custom_call.1} parent=31 // pred_check
          %p225 = pneg %p91
        $region38: #{tpu_custom_call.1} parent=31 // pred_check_branch
          %227 = sbr.rel (%p225) target = $region40
        $region39: #{tpu_custom_call.1} parent=31 // pred_region
          %228 = dma.done [#allocation7], 512
        $region40: #{tpu_custom_call.1} parent=31 // pred_fallthru
          _
        %s229 = sand.u32 %s50, 1
        %s230 = scalar_lea.sflag [#allocation4], %s229
        %s231 = sand.u32 %s50, 1
        %s232 = smul.addr %s231, 16
        %s233 = scalar_lea.vmem [#allocation3], %s232
        %p234 = pneg %p63
        %p235 = pneg %p60
        %p236 = pneg %p91
        %p237 = pneg %p88
        %p238 = scmp.lt.s32.totalorder %s27, 0
        %s239 = scalar_select %p238, %s27, 0
        %s240 = scalar_lea.vmem %s2, %s239
        %p241 = pneg %p117
        %p242 = pneg %p114
        %p243 = pneg %p145
        %p244 = pneg %p142
        %s245 = sand.u32 %s132, 1
        %s246 = scalar_lea.sflag [#allocation5], %s245
        %s247 = sand.u32 %s132, 1
        %s248 = smul.addr %s247, 16
        %s249 = scalar_lea.vmem [#allocation8], %s248
        %s250 = smul.u32 2, %s26
        %s251 = smul.u32 4, %s28
        %p252 = scmp.lt.s32.totalorder %s27, 0
        %s253 = scalar_select %p252, %s27, 0
        %s254 = scalar_lea.vmem %s2, %s253
        %s255 = smul.u32 2, %s26
        %p256 = scmp.eq.s32.totalorder %s28, 0
        // Predicated region
        $region41: #{tpu_custom_call.1} parent=31 // pred_check
          %p257 = pneg %p256
        $region42: #{tpu_custom_call.1} parent=31 // pred_check_branch
          %259 = sbr.rel (%p257) target = $region44
        $region43: #{tpu_custom_call.1} parent=31 // pred_region
          %vm260 = vcmask 261120
          %261 = vst.msk [vmem:[#allocation2] sm:$0xff] %vm260, 0.0
          %262 = vst.msk [vmem:[#allocation2 + $0x8] sm:$0xff] %vm260, 0.0
        $region44: #{tpu_custom_call.1} parent=31 // pred_fallthru
          _
        %v263 = vld [vmem:[#allocation2] sm:$0xff]
        %v264 = vld [vmem:[#allocation2 + $0x8] sm:$0xff]
        %v265 = vld [vmem:[%s220] sm:$0xff]
        %v266 = vld [vmem:[%s220 + $0x8] sm:$0xff]
        %v267 = vld [vmem:[#allocation6] sm:$0xff]
        %v268 = vld [vmem:[#allocation6 + $0x8] sm:$0xff]
        %v269 = vld [vmem:[#allocation6 + $0x10] sm:$0xff]
        %v270 = vld [vmem:[#allocation6 + $0x18] sm:$0xff]
        %vm271 = vcmask 261120
        %v273 = vsel %vm271, %v265, 0
        %v276 = vsel %vm271, %v266, 0
        %278 = vmatprep.subr.mxu0 0.0
        %279 = vmatpush1.msra.mxu0 %v267
        %280 = vmatprep.subr.mxu0 0.0
        %281 = vmatpush1.msra.mxu0 %v268
        %282 = vmatprep.subr.mxu0 0.0
        %283 = vmatpush1.msra.mxu0 %v269
        %284 = vmatprep.subr.mxu0 0.0
        %285 = vmatpush1.msra.mxu0 %v270
        %286 = vmatprep.subr.mxu0 0.0
        %287 = vmatpush1.msra.mxu0 0.0
        %288 = vmatprep.subr.mxu0 0.0
        %289 = vmatpush1.msra.mxu0 0.0
        %290 = vmatprep.subr.mxu0 0.0
        %291 = vmatpush1.msra.mxu0 0.0
        %292 = vmatprep.subr.mxu0 0.0
        %293 = vmatpush1.msra.mxu0 0.0
        %294 = vmatprep.subr.mxu0 0.0
        %295 = vmatpush1.msra.mxu0 0.0
        %296 = vmatprep.subr.mxu0 0.0
        %297 = vmatpush1.msra.mxu0 0.0
        %298 = vmatprep.subr.mxu0 0.0
        %299 = vmatpush1.msra.mxu0 0.0
        %300 = vmatprep.subr.mxu0 0.0
        %301 = vmatpush1.msra.mxu0 0.0
        %302 = vmatprep.subr.mxu0 0.0
        %303 = vmatpush1.msra.mxu0 0.0
        %304 = vmatprep.subr.mxu0 0.0
        %305 = vmatpush1.msra.mxu0 0.0
        %306 = vmatprep.subr.mxu0 0.0
        %307 = vmatpush1.msra.mxu0 0.0
        %308 = vmatprep.subr.mxu0 0.0
        %309 = vmatpush1.msra.mxu0 0.0
        %310 = vmatprep.subr.mxu0 0.0
        %311 = vmatpush1.msra.mxu0 0.0
        %312 = vmatprep.subr.mxu0 0.0
        %313 = vmatpush1.msra.mxu0 0.0
        %314 = vmatprep.subr.mxu0 0.0
        %315 = vmatpush1.msra.mxu0 0.0
        %316 = vmatprep.subr.mxu0 0.0
        %317 = vmatpush1.msra.mxu0 0.0
        %318 = vmatprep.subr.mxu0 0.0
        %319 = vmatpush1.msra.mxu0 0.0
        %320 = vmatprep.subr.mxu0 0.0
        %321 = vmatpush1.msra.mxu0 0.0
        %322 = vmatprep.subr.mxu0 0.0
        %323 = vmatpush1.msra.mxu0 0.0
        %324 = vmatprep.subr.mxu0 0.0
        %325 = vmatpush1.msra.mxu0 0.0
        %326 = vmatprep.subr.mxu0 0.0
        %327 = vmatpush1.msra.mxu0 0.0
        %328 = vmatprep.subr.mxu0 0.0
        %329 = vmatpush1.msra.mxu0 0.0
        %330 = vmatprep.subr.mxu0 0.0
        %331 = vmatpush1.msra.mxu0 0.0
        %332 = vmatprep.subr.mxu0 0.0
        %333 = vmatpush1.msra.mxu0 0.0
        %334 = vmatprep.subr.mxu0 0.0
        %335 = vmatpush1.msra.mxu0 0.0
        %336 = vmatprep.subr.mxu0 0.0
        %337 = vmatpush1.msra.mxu0 0.0
        %338 = vmatprep.subr.mxu0 0.0
        %339 = vmatpush1.msra.mxu0 0.0
        %340 = vmatprep.subr.mxu0 0.0
        %341 = vmatpush1.msra.mxu0 0.0
        %342 = vmatprep.mubr.f32.mxu0 0.0
        %343 = vmatmul.mubr.f32.gmra.mrb[0].mxu0 %v273
        %v344 = vpop.f32.mrb[0].mxu0
        %v345 = vadd.f32 0.0, %v344
        %v346 = vpop.f32.mrb[0].mxu0
        %347 = vmatprep.mubr.f32.mxu0 0.0
        %348 = vmatmul.mubr.f32.gmra.mrb[0].mxu0 %v276
        %v349 = vpop.f32.mrb[0].mxu0
        %v350 = vadd.f32 0.0, %v349
        %v351 = vpop.f32.mrb[0].mxu0
        %352 = vdwg.mxu0
        %v353 = vadd.f32 %v263, %v345
        %v354 = vadd.f32 %v264, %v350
        %355 = vst.msk [vmem:[#allocation2] sm:$0xff] %vm271, %v353
        %356 = vst.msk [vmem:[#allocation2 + $0x8] sm:$0xff] %vm271, %v354
        // Predicated region
        $region45: #{tpu_custom_call.1} parent=31 // pred_check
          %p357 = pneg %p256
        $region46: #{tpu_custom_call.1} parent=31 // pred_check_branch
          %359 = sbr.rel (%p357) target = $region48
        $region47: #{tpu_custom_call.1} parent=31 // pred_region
          %v360 = vld [vmem:[#allocation2] sm:$0xff]
          %v361 = vld [vmem:[#allocation2 + $0x8] sm:$0xff]
          %v362 = vld [vmem:[%s254] sm:$0x1]
          %v364 = vlaneseq
          %v365 = vshrl.u32 %v364, 7
          %v366 = vsub.s32 0, %v365
          %v367 = vrot.slane %v362, %v366
          %v369 = vadd.f32 %v360, %v367
          %v370 = vadd.f32 %v361, %v367
          %371 = vst.msk [vmem:[%s249] sm:$0xff] %vm271, %v369
          %372 = vst.msk [vmem:[%s249 + $0x8] sm:$0xff] %vm271, %v370
        $region48: #{tpu_custom_call.1} parent=31 // pred_fallthru
          _
        %s373 = sand.u32 %s132, 1
        %s374 = scalar_lea.sflag [#allocation5], %s373
        %s375 = sand.u32 %s132, 1
        %s376 = smul.addr %s375, 16
        %s377 = scalar_lea.vmem [#allocation8], %s376
        // Predicated region
        $region49: #{tpu_custom_call.1} parent=31 // pred_check
          %p378 = pneg %p142
        $region50: #{tpu_custom_call.1} parent=31 // pred_check_branch
          %380 = sbr.rel (%p378) target = $region52
        $region51: #{tpu_custom_call.1} parent=31 // pred_region
          %s381 = smul.u32 2, %s26
          %s383 = ssub.s32 256, 256
          %384 = vsyncadd %s374, %s383
          %s385 = sadd.s32 %s27, %s381
          %s386 = smul.addr %s385, 128
          %s387 = scalar_lea.hbm %s3, %s386
          %s388 = sshll.u32 %s377, 4
          %s389 = int_to_ptr.vmem [resolvable:$true] %s388
          %394 = dma.vmem_to_hbm [thread:$0]  %s389, 256, %s387, %s374, 128, 128, 8
        $region52: #{tpu_custom_call.1} parent=31 // pred_fallthru
          _
      $region32: #{tpu_custom_call.1} parent=5 // pred_fallthru
        _
      %p395 = scmp.le.s32.totalorder 2, %s16
      // Predicated region
      $region53: #{tpu_custom_call.1} parent=5 // pred_check
        %p396 = pneg %p395
      $region54: #{tpu_custom_call.1} parent=5 // pred_check_branch
        %398 = sbr.rel (%p396) target = $region56
      $region55: #{tpu_custom_call.1} parent=5 // pred_region
        %s399 = ssub.s32 %s16, 2
        // Predicated region
        $region57: #{tpu_custom_call.1} parent=55 // pred_check
          %p400 = pneg %p148
        $region58: #{tpu_custom_call.1} parent=55 // pred_check_branch
          %402 = sbr.rel (%p400) target = $region60
        $region59: #{tpu_custom_call.1} parent=55 // pred_region
          %s403 = sand.u32 %s133, 1
          %s404 = scalar_lea.sflag [#allocation5], %s403
          %s405 = sand.u32 %s133, 1
          %s406 = smul.addr %s405, 16
          %s407 = scalar_lea.vmem [#allocation8], %s406
          %408 = dma.done %s404, 256
        $region60: #{tpu_custom_call.1} parent=55 // pred_fallthru
          _
      $region56: #{tpu_custom_call.1} parent=5 // pred_fallthru
        _
    $region6: #{tpu_custom_call.1} parent=1 // loop_footer
      %s20 = sadd.s32 1, %s16
    $region7: #{tpu_custom_call.1} parent=1 // loop_footer_branch
      %15 = sbr.rel target = $region3
    $region8: #{tpu_custom_call.1} parent=1 // loop_exit
      _
    %409 = vsyncpa [#allocation4], 1
    %s410 = scalar_lea.sflag [#allocation4], 1
    %411 = vsyncpa %s410, 1
    %412 = vsyncpa [#allocation7], 1
    %413 = vsyncpa [#allocation5], 1
    %s414 = scalar_lea.sflag [#allocation5], 1
    %415 = vsyncpa %s414, 1

</llo_original>
